<compile_context>
chip_gen: v5e
topology: v5e:2x2
jax: 0.10.0
libtpu: 0.0.40
codegen_flags: <defaults>
</compile_context>

<pallas_src>
import jax
import jax.numpy as jnp
from jax.experimental import pallas as pl
from jax.experimental.pallas import tpu as pltpu


def _round_up(x, m):
    return (x + m - 1) // m * m


def _vmem_limit_bytes():
    """Generation-aware VMEM budget: ~3/4 of physical VMEM.
    v5e/v6e: 128 MiB physical -> 96 MiB; v7x: 64 MiB physical -> 48 MiB."""
    cap = 64 * 1024 * 1024  # conservative default (v7x physical size)
    try:
        cap = int(pltpu.get_tpu_info().vmem_capacity_bytes)
    except Exception:
        pass
    return max(32 * 1024 * 1024, min(cap * 3 // 4, 96 * 1024 * 1024))


def _mlp_kernel(x_ref, w2_ref, b2_ref, w3_ref, b3_ref, o_ref):
    # x arrives as f32; cast to bf16 in-register (VPU, hidden under the MXU).
    x = x_ref[...].astype(jnp.bfloat16)

    # out = relu(l2(x))  -- bf16 operands, f32 MXU accumulation.
    h = jnp.maximum(
        jnp.dot(x, w2_ref[...], preferred_element_type=jnp.float32) + b2_ref[...],
        0.0,
    )

    # out = l3(out)
    o_ref[...] = (
        jnp.dot(h.astype(jnp.bfloat16), w3_ref[...],
                preferred_element_type=jnp.float32)
        + b3_ref[...]
    ).astype(o_ref.dtype)


def _pallas_forward(x_p, w2t, b2, w3t, b3, TB, out_size, grid,
                    single_buffer_weights):
    def resident(shape):
        # Same block every grid step -> VMEM-resident across the batch loop.
        index_map = lambda *_: (0,) * len(shape)
        if single_buffer_weights:
            return pl.BlockSpec(shape, index_map, pipeline_mode=pl.Buffered(1))
        return pl.BlockSpec(shape, index_map)

    in_size = x_p.shape[1]
    return pl.pallas_call(
        _mlp_kernel,
        out_shape=jax.ShapeDtypeStruct((x_p.shape[0], out_size), jnp.float32),
        grid=grid,
        in_specs=[
            pl.BlockSpec((TB, in_size), lambda i: (i, 0)),  # x: tiled over batch
            resident(w2t.shape),
            resident(b2.shape),
            resident(w3t.shape),
            resident(b3.shape),
        ],
        out_specs=pl.BlockSpec((TB, out_size), lambda i: (i, 0)),
        compiler_params=pltpu.CompilerParams(
            dimension_semantics=("parallel",),
            vmem_limit_bytes=_vmem_limit_bytes(),
        ),
    )(x_p, w2t, b2, w3t, b3)


def prepare_params(params):
    """One-time weight preparation (hoisted out of the per-call path).

    Drops the dead l1 branch, casts live matmul operands to bf16 (native MXU
    dtype), keeps biases in f32 for the f32 bias-add/ReLU path."""
    return dict(
        w2t=params["w2t"].astype(jnp.bfloat16),
        b2=params["b2"].astype(jnp.float32),
        w3t=params["w3t"].astype(jnp.bfloat16),
        b3=params["b3"].astype(jnp.float32),
    )


def neural_net_forward(x, prep):
    """x: (B, inputSize) f32, prep from prepare_params().
    Returns (B, outputSize) f32 = l3(relu(l2(x)))."""
    w2t, b2, w3t, b3 = prep["w2t"], prep["b2"], prep["w3t"], prep["b3"]
    B, in_size = x.shape
    hidden, out_size = w3t.shape
    # Module only type-checks when inputSize == hiddenSize (l2 acts on x).
    assert in_size == w2t.shape[0] == hidden

    # Batch tiling: fat tiles amortize per-step pipeline overhead; >=2 steps
    # for large B so the "parallel" axis shards across v7x's two TCs.
    if B >= 1024:
        TB = 512
    elif B >= 128:
        TB = 128
    else:
        TB = _round_up(B, 8)  # full-batch single tile for small B
    B_pad = _round_up(B, TB)
    x_p = jnp.pad(x, ((0, B_pad - B), (0, 0))) if B_pad != B else x

    grid = (B_pad // TB,)

    try:
        out = _pallas_forward(x_p, w2t, b2, w3t, b3, TB, out_size, grid,
                              single_buffer_weights=True)
    except Exception:
        # pipeline_mode=pl.Buffered(1) unsupported on this build: fall back to
        # default (double-buffered) resident weights -- correct, more VMEM.
        out = _pallas_forward(x_p, w2t, b2, w3t, b3, TB, out_size, grid,
                              single_buffer_weights=False)

    return out[:B] if B_pad != B else out


def init_params(key, input_size, hidden_size, output_size):
    """Deterministic init mimicking nn.Linear's U(-1/sqrt(fan_in), 1/sqrt(fan_in))."""
    ks = jax.random.split(key, 6)

    def linear(kw, kb, fan_in, fan_out):
        bound = 1.0 / jnp.sqrt(fan_in)
        w = jax.random.uniform(kw, (fan_out, fan_in), jnp.float32, -bound, bound)
        b = jax.random.uniform(kb, (fan_out,), jnp.float32, -bound, bound)
        # store transposed weight (fan_in, fan_out) and bias as (1, fan_out)
        return w.T, b.reshape(1, fan_out)

    w1t, b1 = linear(ks[0], ks[1], input_size, hidden_size)   # dead in forward
    w2t, b2 = linear(ks[2], ks[3], hidden_size, hidden_size)  # l2 applied to x
    w3t, b3 = linear(ks[4], ks[5], hidden_size, output_size)
    return dict(w1t=w1t, b1=b1, w2t=w2t, b2=b2, w3t=w3t, b3=b3)


def reference_forward(x, p):
    """Pure-JAX reference matching the PyTorch module's forward semantics
    (l1 output discarded; l2 acts on x) with the same bf16 operand casts and
    f32 accumulation as the kernel."""
    xb = x.astype(jnp.bfloat16)
    h = jnp.maximum(
        jnp.dot(xb, p["w2t"].astype(jnp.bfloat16),
                preferred_element_type=jnp.float32) + p["b2"],
        0.0,
    )
    return (
        jnp.dot(h.astype(jnp.bfloat16), p["w3t"].astype(jnp.bfloat16),
                preferred_element_type=jnp.float32)
        + p["b3"]
    )


if __name__ == "__main__":
    # inputSize must equal hiddenSize for the reference forward to run at all.
    batch, input_size, hidden_size, output_size = 8, 32, 32, 16

    key = jax.random.PRNGKey(0)
    kx, kp = jax.random.split(key)
    x = jax.random.normal(kx, (batch, input_size), jnp.float32)
    params = init_params(kp, input_size, hidden_size, output_size)
    prep = prepare_params(params)  # one-time weight prep, outside the call path

    out = neural_net_forward(x, prep)
    out = jax.block_until_ready(out)

    ref = reference_forward(x, params)
    assert out.shape == (batch, output_size)
    assert jnp.allclose(out, ref, atol=1e-2, rtol=1e-2), (
        float(jnp.max(jnp.abs(out - ref)))
    )

    print("KERNEL_OK")
</pallas_src>

<mosaic_0001>
module attributes {stable_mosaic.version = 11 : i64} {
  func.func @_mlp_kernel(%arg0: i32, %arg1: memref<8x32xf32, #tpu.memory_space<vmem>>, %arg2: memref<32x32xbf16, #tpu.memory_space<vmem>>, %arg3: memref<1x32xf32, #tpu.memory_space<vmem>>, %arg4: memref<32x16xbf16, #tpu.memory_space<vmem>>, %arg5: memref<1x16xf32, #tpu.memory_space<vmem>>, %arg6: memref<8x16xf32, #tpu.memory_space<vmem>>) attributes {dimension_semantics = [#tpu.dimension_semantics<parallel>], iteration_bounds = array<i64: 1>, scalar_prefetch = 0 : i64, scratch_operands = 0 : i64, tpu.core_type = #tpu.core_type<tc>, window_params = [{transform_indices = @transform_0, window_bounds = array<i64: 8, 32>}, {pipeline_mode = #tpu.pipeline_mode<synchronous>, transform_indices = @transform_1, window_bounds = array<i64: 32, 32>}, {pipeline_mode = #tpu.pipeline_mode<synchronous>, transform_indices = @transform_2, window_bounds = array<i64: 1, 32>}, {pipeline_mode = #tpu.pipeline_mode<synchronous>, transform_indices = @transform_3, window_bounds = array<i64: 32, 16>}, {pipeline_mode = #tpu.pipeline_mode<synchronous>, transform_indices = @transform_4, window_bounds = array<i64: 1, 16>}, {transform_indices = @transform_5, window_bounds = array<i64: 8, 16>}]} {
    %c0 = arith.constant 0 : index
    %c0_0 = arith.constant 0 : index
    %0 = vector.load %arg1[%c0, %c0_0] : memref<8x32xf32, #tpu.memory_space<vmem>>, vector<8x32xf32>
    %1 = arith.truncf %0 : vector<8x32xf32> to vector<8x32xbf16>
    %c0_1 = arith.constant 0 : index
    %c0_2 = arith.constant 0 : index
    %2 = vector.load %arg2[%c0_1, %c0_2] : memref<32x32xbf16, #tpu.memory_space<vmem>>, vector<32x32xbf16>
    %cst = arith.constant dense<0.000000e+00> : vector<8x32xf32>
    %3 = tpu.matmul %1, %2, %cst {dimension_numbers = #tpu.dot_dimension_numbers<[1], [0], [0], [1], [0, 0, 1, 1], [], []>} : vector<8x32xbf16>, vector<32x32xbf16>, vector<8x32xf32> -> vector<8x32xf32>
    %c0_3 = arith.constant 0 : index
    %c0_4 = arith.constant 0 : index
    %4 = vector.load %arg3[%c0_3, %c0_4] : memref<1x32xf32, #tpu.memory_space<vmem>>, vector<1x32xf32>
    %5 = vector.broadcast %4 : vector<1x32xf32> to vector<8x32xf32>
    %6 = arith.addf %3, %5 : vector<8x32xf32>
    %cst_5 = arith.constant 0.000000e+00 : f32
    %7 = vector.broadcast %cst_5 : f32 to vector<8x32xf32>
    %8 = arith.maximumf %6, %7 : vector<8x32xf32>
    %9 = arith.truncf %8 : vector<8x32xf32> to vector<8x32xbf16>
    %c0_6 = arith.constant 0 : index
    %c0_7 = arith.constant 0 : index
    %10 = vector.load %arg4[%c0_6, %c0_7] : memref<32x16xbf16, #tpu.memory_space<vmem>>, vector<32x16xbf16>
    %cst_8 = arith.constant dense<0.000000e+00> : vector<8x16xf32>
    %11 = tpu.matmul %9, %10, %cst_8 {dimension_numbers = #tpu.dot_dimension_numbers<[1], [0], [0], [1], [0, 0, 1, 1], [], []>} : vector<8x32xbf16>, vector<32x16xbf16>, vector<8x16xf32> -> vector<8x16xf32>
    %c0_9 = arith.constant 0 : index
    %c0_10 = arith.constant 0 : index
    %12 = vector.load %arg5[%c0_9, %c0_10] : memref<1x16xf32, #tpu.memory_space<vmem>>, vector<1x16xf32>
    %13 = vector.broadcast %12 : vector<1x16xf32> to vector<8x16xf32>
    %14 = arith.addf %11, %13 : vector<8x16xf32>
    %c0_11 = arith.constant 0 : index
    %c0_12 = arith.constant 0 : index
    %15 = vector.load %arg6[%c0_11, %c0_12] : memref<8x16xf32, #tpu.memory_space<vmem>>, vector<8x16xf32>
    tpu.vector_store %arg6[%c0_11, %c0_12], %14 {strides = array<i32>} : memref<8x16xf32, #tpu.memory_space<vmem>>, vector<8x16xf32>,
    return
  }
  func.func @transform_0(%arg0: i32) -> (i32, i32) {
    %c0_i32 = arith.constant 0 : i32
    %c0_i32_0 = arith.constant 0 : i32
    return %arg0, %c0_i32 : i32, i32
  }
  func.func @transform_1(%arg0: i32) -> (i32, i32) {
    %c0_i32 = arith.constant 0 : i32
    %c0_i32_0 = arith.constant 0 : i32
    %c0_i32_1 = arith.constant 0 : i32
    return %c0_i32, %c0_i32_0 : i32, i32
  }
  func.func @transform_2(%arg0: i32) -> (i32, i32) {
    %c0_i32 = arith.constant 0 : i32
    %c0_i32_0 = arith.constant 0 : i32
    %c0_i32_1 = arith.constant 0 : i32
    return %c0_i32, %c0_i32_0 : i32, i32
  }
  func.func @transform_3(%arg0: i32) -> (i32, i32) {
    %c0_i32 = arith.constant 0 : i32
    %c0_i32_0 = arith.constant 0 : i32
    %c0_i32_1 = arith.constant 0 : i32
    return %c0_i32, %c0_i32_0 : i32, i32
  }
  func.func @transform_4(%arg0: i32) -> (i32, i32) {
    %c0_i32 = arith.constant 0 : i32
    %c0_i32_0 = arith.constant 0 : i32
    %c0_i32_1 = arith.constant 0 : i32
    return %c0_i32, %c0_i32_0 : i32, i32
  }
  func.func @transform_5(%arg0: i32) -> (i32, i32) {
    %c0_i32 = arith.constant 0 : i32
    %c0_i32_0 = arith.constant 0 : i32
    return %arg0, %c0_i32 : i32, i32
  }
}

module attributes {stable_mosaic.version = 11 : i64} {
  func.func @_mlp_kernel(%arg0: i32, %arg1: memref<8x32xf32, #tpu.memory_space<vmem>>, %arg2: memref<32x32xbf16, #tpu.memory_space<vmem>>, %arg3: memref<1x32xf32, #tpu.memory_space<vmem>>, %arg4: memref<32x16xbf16, #tpu.memory_space<vmem>>, %arg5: memref<1x16xf32, #tpu.memory_space<vmem>>, %arg6: memref<8x16xf32, #tpu.memory_space<vmem>>) attributes {dimension_semantics = [#tpu.dimension_semantics<parallel>], iteration_bounds = array<i64: 1>, scalar_prefetch = 0 : i64, scratch_operands = 0 : i64, tpu.core_type = #tpu.core_type<tc>, window_params = [{transform_indices = @transform_0, window_bounds = array<i64: 8, 32>}, {pipeline_mode = #tpu.pipeline_mode<synchronous>, transform_indices = @transform_1, window_bounds = array<i64: 32, 32>}, {pipeline_mode = #tpu.pipeline_mode<synchronous>, transform_indices = @transform_2, window_bounds = array<i64: 1, 32>}, {pipeline_mode = #tpu.pipeline_mode<synchronous>, transform_indices = @transform_3, window_bounds = array<i64: 32, 16>}, {pipeline_mode = #tpu.pipeline_mode<synchronous>, transform_indices = @transform_4, window_bounds = array<i64: 1, 16>}, {transform_indices = @transform_5, window_bounds = array<i64: 8, 16>}]} {
    %c0 = arith.constant 0 : index
    %c0_0 = arith.constant 0 : index
    %0 = vector.load %arg1[%c0, %c0_0] : memref<8x32xf32, #tpu.memory_space<vmem>>, vector<8x32xf32>
    %1 = arith.truncf %0 : vector<8x32xf32> to vector<8x32xbf16>
    %c0_1 = arith.constant 0 : index
    %c0_2 = arith.constant 0 : index
    %2 = vector.load %arg2[%c0_1, %c0_2] : memref<32x32xbf16, #tpu.memory_space<vmem>>, vector<32x32xbf16>
    %cst = arith.constant dense<0.000000e+00> : vector<8x32xf32>
    %3 = tpu.matmul %1, %2, %cst {dimension_numbers = #tpu.dot_dimension_numbers<[1], [0], [0], [1], [0, 0, 1, 1], [], []>} : vector<8x32xbf16>, vector<32x32xbf16>, vector<8x32xf32> -> vector<8x32xf32>
    %c0_3 = arith.constant 0 : index
    %c0_4 = arith.constant 0 : index
    %4 = vector.load %arg3[%c0_3, %c0_4] : memref<1x32xf32, #tpu.memory_space<vmem>>, vector<1x32xf32>
    %5 = vector.broadcast %4 : vector<1x32xf32> to vector<8x32xf32>
    %6 = arith.addf %3, %5 : vector<8x32xf32>
    %cst_5 = arith.constant 0.000000e+00 : f32
    %7 = vector.broadcast %cst_5 : f32 to vector<8x32xf32>
    %8 = arith.maximumf %6, %7 : vector<8x32xf32>
    %9 = arith.truncf %8 : vector<8x32xf32> to vector<8x32xbf16>
    %c0_6 = arith.constant 0 : index
    %c0_7 = arith.constant 0 : index
    %10 = vector.load %arg4[%c0_6, %c0_7] : memref<32x16xbf16, #tpu.memory_space<vmem>>, vector<32x16xbf16>
    %cst_8 = arith.constant dense<0.000000e+00> : vector<8x16xf32>
    %11 = tpu.matmul %9, %10, %cst_8 {dimension_numbers = #tpu.dot_dimension_numbers<[1], [0], [0], [1], [0, 0, 1, 1], [], []>} : vector<8x32xbf16>, vector<32x16xbf16>, vector<8x16xf32> -> vector<8x16xf32>
    %c0_9 = arith.constant 0 : index
    %c0_10 = arith.constant 0 : index
    %12 = vector.load %arg5[%c0_9, %c0_10] : memref<1x16xf32, #tpu.memory_space<vmem>>, vector<1x16xf32>
    %13 = vector.broadcast %12 : vector<1x16xf32> to vector<8x16xf32>
    %14 = arith.addf %11, %13 : vector<8x16xf32>
    %c0_11 = arith.constant 0 : index
    %c0_12 = arith.constant 0 : index
    %15 = vector.load %arg6[%c0_11, %c0_12] : memref<8x16xf32, #tpu.memory_space<vmem>>, vector<8x16xf32>
    tpu.vector_store %arg6[%c0_11, %c0_12], %14 {strides = array<i32>} : memref<8x16xf32, #tpu.memory_space<vmem>>, vector<8x16xf32>,
    return
  }
  func.func @transform_0(%arg0: i32) -> (i32, i32) {
    %c0_i32 = arith.constant 0 : i32
    %c0_i32_0 = arith.constant 0 : i32
    return %arg0, %c0_i32 : i32, i32
  }
  func.func @transform_1(%arg0: i32) -> (i32, i32) {
    %c0_i32 = arith.constant 0 : i32
    %c0_i32_0 = arith.constant 0 : i32
    %c0_i32_1 = arith.constant 0 : i32
    return %c0_i32, %c0_i32_0 : i32, i32
  }
  func.func @transform_2(%arg0: i32) -> (i32, i32) {
    %c0_i32 = arith.constant 0 : i32
    %c0_i32_0 = arith.constant 0 : i32
    %c0_i32_1 = arith.constant 0 : i32
    return %c0_i32, %c0_i32_0 : i32, i32
  }
  func.func @transform_3(%arg0: i32) -> (i32, i32) {
    %c0_i32 = arith.constant 0 : i32
    %c0_i32_0 = arith.constant 0 : i32
    %c0_i32_1 = arith.constant 0 : i32
    return %c0_i32, %c0_i32_0 : i32, i32
  }
  func.func @transform_4(%arg0: i32) -> (i32, i32) {
    %c0_i32 = arith.constant 0 : i32
    %c0_i32_0 = arith.constant 0 : i32
    %c0_i32_1 = arith.constant 0 : i32
    return %c0_i32, %c0_i32_0 : i32, i32
  }
  func.func @transform_5(%arg0: i32) -> (i32, i32) {
    %c0_i32 = arith.constant 0 : i32
    %c0_i32_0 = arith.constant 0 : i32
    return %arg0, %c0_i32 : i32, i32
  }
}

</mosaic_0001>

<llo_original>
// kernel: tpu_custom_call.1
$region0: #{tpu_custom_call.1}
  #allocation0 [shape = 'u32[]', space=smem, size = 0x4, offset = 0x4, fixed_abs, tag = 'smem constant byte address 0x4 - core index']
  #allocation1 [shape = 'u32[72,128]{1,0:T(1,128)}', space=vmem, size = 0x9000, scoped, tag = 'internal scratch']
  %s0 = inlined_call_operand.vmem [shape: f32[8,32], index: 0, kind: input, shape index: {}]
  %s1 = inlined_call_operand.vmem [shape: bf16[32,32], index: 1, kind: input, shape index: {}]
  %s2 = inlined_call_operand.vmem [shape: f32[1,32], index: 2, kind: input, shape index: {}]
  %s3 = inlined_call_operand.vmem [shape: bf16[32,16], index: 3, kind: input, shape index: {}]
  %s4 = inlined_call_operand.vmem [shape: f32[1,16], index: 4, kind: input, shape index: {}]
  %s5 = inlined_call_operand.hbm [shape: f32[8,16], index: 5, kind: output, shape index: {}]
  %s6 = sld [smem:[#allocation0]]
  $region30: #{tpu_custom_call.1} parent=0
    _
  %s8 = ssub.s32 1, %s6
  %s9 = scalar_select 0, %s8, %s6
  $region1: #{tpu_custom_call.1} parent=0
    #allocation2 [shape = 'u8[4096]{0}', space=vmem, size = 0x1000, scoped, tag = 'output window, operand 0, single buffered']
    #allocation3 [shape = 's32[1]{0}', space=sflag, size = 0x4, scoped, tag = 'scoped memory for tpu_custom_call.1']
    %10 = vsyncpa [#allocation3], 0
    // Predicated region
    $region2: #{tpu_custom_call.1} parent=1 // pred_check
      _
    $region3: #{tpu_custom_call.1} parent=1 // pred_check_branch
      %12 = sbr.rel (0) target = $region5
    $region4: #{tpu_custom_call.1} parent=1 // pred_region
      _
    $region5: #{tpu_custom_call.1} parent=1 // pred_fallthru
      _
    // Predicated region
    $region6: #{tpu_custom_call.1} parent=1 // pred_check
      _
    $region7: #{tpu_custom_call.1} parent=1 // pred_check_branch
      %14 = sbr.rel (0) target = $region9
    $region8: #{tpu_custom_call.1} parent=1 // pred_region
      _
    $region9: #{tpu_custom_call.1} parent=1 // pred_fallthru
      _
    // Predicated region
    $region10: #{tpu_custom_call.1} parent=1 // pred_check
      _
    $region11: #{tpu_custom_call.1} parent=1 // pred_check_branch
      %16 = sbr.rel (0) target = $region13
    $region12: #{tpu_custom_call.1} parent=1 // pred_region
      _
    $region13: #{tpu_custom_call.1} parent=1 // pred_fallthru
      _
    // Predicated region
    $region14: #{tpu_custom_call.1} parent=1 // pred_check
      _
    $region15: #{tpu_custom_call.1} parent=1 // pred_check_branch
      %18 = sbr.rel (0) target = $region17
    $region16: #{tpu_custom_call.1} parent=1 // pred_region
      _
    $region17: #{tpu_custom_call.1} parent=1 // pred_fallthru
      _
    // Predicated region
    $region18: #{tpu_custom_call.1} parent=1 // pred_check
      _
    $region19: #{tpu_custom_call.1} parent=1 // pred_check_branch
      %20 = sbr.rel (0) target = $region21
    $region20: #{tpu_custom_call.1} parent=1 // pred_region
      _
    $region21: #{tpu_custom_call.1} parent=1 // pred_fallthru
      _
    %v22 = vld [vmem:[%s0] sm:$0xff]
    %v23 = vpack.c.bf16 %v22, %v22
    %v24 = vld [vmem:[%s1] sm:$0xf]
    %v25 = vld [vmem:[%s1 + $0x4] sm:$0xf]
    %v26 = vld [vmem:[%s1 + $0x8] sm:$0xf]
    %v27 = vld [vmem:[%s1 + $0xc] sm:$0xf]
    %v28 = vld [vmem:[%s2] sm:$0x1]
    %v30 = vperm.slane %v28, 0
    %v36 = vunpack.c.l.b16 %v24
    %v37 = vunpack.c.l.b16 %v25
    %v38 = vunpack.c.l.b16 %v26
    %v39 = vunpack.c.l.b16 %v27
    %v40 = vpack.c.b16 %v37, %v36
    %v41 = vpack.c.b16 %v39, %v38
    %vm44 = vcmask 261120
    %v46 = vsel %vm44, %v23, 0
    %48 = vmatpush.bf16.msra.mxu0 0
    %49 = vmatpush.bf16.msra.mxu0 0
    %50 = vmatpush.bf16.msra.mxu0 0
    %51 = vmatpush.bf16.msra.mxu0 0
    %52 = vmatpush.bf16.msra.mxu0 0
    %53 = vmatpush.bf16.msra.mxu0 0
    %54 = vmatpush.bf16.msra.mxu0 %v41
    %55 = vmatpush.bf16.msra.mxu0 %v40
    %56 = vmatmul.bf16.gmra.mxu0 %v46
    %v57 = vpop.f32.mrf.mxu0
    %v58 = vadd.f32 %v30, %v57
    %v59 = vpop.f32.mrf.mxu0
    %60 = vdwg.mxu0
    %v61 = vmax.f32 %v58, 0.0
    %v62 = vpack.c.bf16 %v61, %v61
    %v63 = vld [vmem:[%s3] sm:$0xf]
    %v64 = vld [vmem:[%s3 + $0x4] sm:$0xf]
    %v65 = vld [vmem:[%s3 + $0x8] sm:$0xf]
    %v66 = vld [vmem:[%s3 + $0xc] sm:$0xf]
    %v67 = vld [vmem:[%s4] sm:$0x1]
    %v69 = vperm.slane %v67, 0
    %v75 = vunpack.c.l.b16 %v63
    %v76 = vunpack.c.l.b16 %v64
    %v77 = vunpack.c.l.b16 %v65
    %v78 = vunpack.c.l.b16 %v66
    %v79 = vpack.c.b16 %v76, %v75
    %v80 = vpack.c.b16 %v78, %v77
    %v84 = vsel %vm44, %v62, 0
    %86 = vmatpush.bf16.msra.mxu0 0
    %87 = vmatpush.bf16.msra.mxu0 0
    %88 = vmatpush.bf16.msra.mxu0 0
    %89 = vmatpush.bf16.msra.mxu0 0
    %90 = vmatpush.bf16.msra.mxu0 0
    %91 = vmatpush.bf16.msra.mxu0 0
    %92 = vmatpush.bf16.msra.mxu0 %v80
    %93 = vmatpush.bf16.msra.mxu0 %v79
    %94 = vmatmul.bf16.gmra.mxu0 %v84
    %v95 = vpop.f32.mrf.mxu0
    %v96 = vadd.f32 %v69, %v95
    %v97 = vpop.f32.mrf.mxu0
    %98 = vdwg.mxu0
    %vm99 = vcmask 130048
    %100 = vst.msk [vmem:[#allocation2] sm:$0xff] %vm99, %v96
    // Predicated region
    $region22: #{tpu_custom_call.1} parent=1 // pred_check
      _
    $region23: #{tpu_custom_call.1} parent=1 // pred_check_branch
      %102 = sbr.rel (0) target = $region25
    $region24: #{tpu_custom_call.1} parent=1 // pred_region
      %104 = vsyncadd [#allocation3], 0
      %s106 = sshll.u32 [#allocation2], 4
      %s107 = int_to_ptr.vmem [resolvable:$true] %s106
      %s108 = sshll.u32 %s5, 4
      %s109 = int_to_ptr.hbm [resolvable:$true] %s108
      %111 = dma.vmem_to_hbm [thread:$0]  %s107, 128, %s109, [#allocation3]
    $region25: #{tpu_custom_call.1} parent=1 // pred_fallthru
      _
    // Predicated region
    $region26: #{tpu_custom_call.1} parent=1 // pred_check
      _
    $region27: #{tpu_custom_call.1} parent=1 // pred_check_branch
      %113 = sbr.rel (0) target = $region29
    $region28: #{tpu_custom_call.1} parent=1 // pred_region
      %115 = dma.done [#allocation3], 128
    $region29: #{tpu_custom_call.1} parent=1 // pred_fallthru
      _
    %116 = vsyncpa [#allocation3], 1

// kernel: tpu_custom_call.1
$region0: #{tpu_custom_call.1}
  #allocation0 [shape = 'u32[]', space=smem, size = 0x4, offset = 0x4, fixed_abs, tag = 'smem constant byte address 0x4 - core index']
  #allocation1 [shape = 'u32[72,128]{1,0:T(1,128)}', space=vmem, size = 0x9000, scoped, tag = 'internal scratch']
  %s0 = inlined_call_operand.vmem [shape: f32[8,32], index: 0, kind: input, shape index: {}]
  %s1 = inlined_call_operand.vmem [shape: bf16[32,32], index: 1, kind: input, shape index: {}]
  %s2 = inlined_call_operand.vmem [shape: f32[1,32], index: 2, kind: input, shape index: {}]
  %s3 = inlined_call_operand.vmem [shape: bf16[32,16], index: 3, kind: input, shape index: {}]
  %s4 = inlined_call_operand.vmem [shape: f32[1,16], index: 4, kind: input, shape index: {}]
  %s5 = inlined_call_operand.hbm [shape: f32[8,16], index: 5, kind: output, shape index: {}]
  %s6 = sld [smem:[#allocation0]]
  $region30: #{tpu_custom_call.1} parent=0
    _
  %s8 = ssub.s32 1, %s6
  %s9 = scalar_select 0, %s8, %s6
  $region1: #{tpu_custom_call.1} parent=0
    #allocation2 [shape = 'u8[4096]{0}', space=vmem, size = 0x1000, scoped, tag = 'output window, operand 0, single buffered']
    #allocation3 [shape = 's32[1]{0}', space=sflag, size = 0x4, scoped, tag = 'scoped memory for tpu_custom_call.1']
    %10 = vsyncpa [#allocation3], 0
    // Predicated region
    $region2: #{tpu_custom_call.1} parent=1 // pred_check
      _
    $region3: #{tpu_custom_call.1} parent=1 // pred_check_branch
      %12 = sbr.rel (0) target = $region5
    $region4: #{tpu_custom_call.1} parent=1 // pred_region
      _
    $region5: #{tpu_custom_call.1} parent=1 // pred_fallthru
      _
    // Predicated region
    $region6: #{tpu_custom_call.1} parent=1 // pred_check
      _
    $region7: #{tpu_custom_call.1} parent=1 // pred_check_branch
      %14 = sbr.rel (0) target = $region9
    $region8: #{tpu_custom_call.1} parent=1 // pred_region
      _
    $region9: #{tpu_custom_call.1} parent=1 // pred_fallthru
      _
    // Predicated region
    $region10: #{tpu_custom_call.1} parent=1 // pred_check
      _
    $region11: #{tpu_custom_call.1} parent=1 // pred_check_branch
      %16 = sbr.rel (0) target = $region13
    $region12: #{tpu_custom_call.1} parent=1 // pred_region
      _
    $region13: #{tpu_custom_call.1} parent=1 // pred_fallthru
      _
    // Predicated region
    $region14: #{tpu_custom_call.1} parent=1 // pred_check
      _
    $region15: #{tpu_custom_call.1} parent=1 // pred_check_branch
      %18 = sbr.rel (0) target = $region17
    $region16: #{tpu_custom_call.1} parent=1 // pred_region
      _
    $region17: #{tpu_custom_call.1} parent=1 // pred_fallthru
      _
    // Predicated region
    $region18: #{tpu_custom_call.1} parent=1 // pred_check
      _
    $region19: #{tpu_custom_call.1} parent=1 // pred_check_branch
      %20 = sbr.rel (0) target = $region21
    $region20: #{tpu_custom_call.1} parent=1 // pred_region
      _
    $region21: #{tpu_custom_call.1} parent=1 // pred_fallthru
      _
    %v22 = vld [vmem:[%s0] sm:$0xff]
    %v23 = vpack.c.bf16 %v22, %v22
    %v24 = vld [vmem:[%s1] sm:$0xf]
    %v25 = vld [vmem:[%s1 + $0x4] sm:$0xf]
    %v26 = vld [vmem:[%s1 + $0x8] sm:$0xf]
    %v27 = vld [vmem:[%s1 + $0xc] sm:$0xf]
    %v28 = vld [vmem:[%s2] sm:$0x1]
    %v30 = vperm.slane %v28, 0
    %v36 = vunpack.c.l.b16 %v24
    %v37 = vunpack.c.l.b16 %v25
    %v38 = vunpack.c.l.b16 %v26
    %v39 = vunpack.c.l.b16 %v27
    %v40 = vpack.c.b16 %v37, %v36
    %v41 = vpack.c.b16 %v39, %v38
    %vm44 = vcmask 261120
    %v46 = vsel %vm44, %v23, 0
    %48 = vmatpush.bf16.msra.mxu0 0
    %49 = vmatpush.bf16.msra.mxu0 0
    %50 = vmatpush.bf16.msra.mxu0 0
    %51 = vmatpush.bf16.msra.mxu0 0
    %52 = vmatpush.bf16.msra.mxu0 0
    %53 = vmatpush.bf16.msra.mxu0 0
    %54 = vmatpush.bf16.msra.mxu0 %v41
    %55 = vmatpush.bf16.msra.mxu0 %v40
    %56 = vmatmul.bf16.gmra.mxu0 %v46
    %v57 = vpop.f32.mrf.mxu0
    %v58 = vadd.f32 %v30, %v57
    %v59 = vpop.f32.mrf.mxu0
    %60 = vdwg.mxu0
    %v61 = vmax.f32 %v58, 0.0
    %v62 = vpack.c.bf16 %v61, %v61
    %v63 = vld [vmem:[%s3] sm:$0xf]
    %v64 = vld [vmem:[%s3 + $0x4] sm:$0xf]
    %v65 = vld [vmem:[%s3 + $0x8] sm:$0xf]
    %v66 = vld [vmem:[%s3 + $0xc] sm:$0xf]
    %v67 = vld [vmem:[%s4] sm:$0x1]
    %v69 = vperm.slane %v67, 0
    %v75 = vunpack.c.l.b16 %v63
    %v76 = vunpack.c.l.b16 %v64
    %v77 = vunpack.c.l.b16 %v65
    %v78 = vunpack.c.l.b16 %v66
    %v79 = vpack.c.b16 %v76, %v75
    %v80 = vpack.c.b16 %v78, %v77
    %v84 = vsel %vm44, %v62, 0
    %86 = vmatpush.bf16.msra.mxu0 0
    %87 = vmatpush.bf16.msra.mxu0 0
    %88 = vmatpush.bf16.msra.mxu0 0
    %89 = vmatpush.bf16.msra.mxu0 0
    %90 = vmatpush.bf16.msra.mxu0 0
    %91 = vmatpush.bf16.msra.mxu0 0
    %92 = vmatpush.bf16.msra.mxu0 %v80
    %93 = vmatpush.bf16.msra.mxu0 %v79
    %94 = vmatmul.bf16.gmra.mxu0 %v84
    %v95 = vpop.f32.mrf.mxu0
    %v96 = vadd.f32 %v69, %v95
    %v97 = vpop.f32.mrf.mxu0
    %98 = vdwg.mxu0
    %vm99 = vcmask 130048
    %100 = vst.msk [vmem:[#allocation2] sm:$0xff] %vm99, %v96
    // Predicated region
    $region22: #{tpu_custom_call.1} parent=1 // pred_check
      _
    $region23: #{tpu_custom_call.1} parent=1 // pred_check_branch
      %102 = sbr.rel (0) target = $region25
    $region24: #{tpu_custom_call.1} parent=1 // pred_region
      %104 = vsyncadd [#allocation3], 0
      %s106 = sshll.u32 [#allocation2], 4
      %s107 = int_to_ptr.vmem [resolvable:$true] %s106
      %s108 = sshll.u32 %s5, 4
      %s109 = int_to_ptr.hbm [resolvable:$true] %s108
      %111 = dma.vmem_to_hbm [thread:$0]  %s107, 128, %s109, [#allocation3]
    $region25: #{tpu_custom_call.1} parent=1 // pred_fallthru
      _
    // Predicated region
    $region26: #{tpu_custom_call.1} parent=1 // pred_check
      _
    $region27: #{tpu_custom_call.1} parent=1 // pred_check_branch
      %113 = sbr.rel (0) target = $region29
    $region28: #{tpu_custom_call.1} parent=1 // pred_region
      %115 = dma.done [#allocation3], 128
    $region29: #{tpu_custom_call.1} parent=1 // pred_fallthru
      _
    %116 = vsyncpa [#allocation3], 1

</llo_original>
